<compile_context>
chip_gen: v7x
topology: tpu7x:2x2x1
jax: 0.10.0
libtpu: 0.0.40
codegen_flags: <defaults>
</compile_context>

<pallas_src>
import functools

import jax
import jax.numpy as jnp
from jax import lax
from jax.experimental import pallas as pl
from jax.experimental.pallas import tpu as pltpu

_NEG_BIG = -1e30   # effectively -inf for masked (padded) classes
_EPS = 1e-12       # clamp for zero-norm rows/columns


def _cosine_margin_loss_kernel(
    x_ref, w_ref, lbl_ref, bias_ref,          # inputs
    loss_ref,                                 # output: per-example loss (tb, 1)
    rnorm_sc, m_sc, l_sc, t_sc, iota_sc, xmm_sc,   # VMEM scratch
    *, scale, scale_margin, c_tile, mask_classes,
):
    k = pl.program_id(1)
    nk = pl.num_programs(1)

    @pl.when(k == 0)
    def _init():
        x = x_ref[...]                                                  # (tb, D) f32
        row_sq = jnp.sum(x * x, axis=1, keepdims=True)                  # (tb, 1)
        # fold the softmax scale into the inverse row norm: s / ||x||
        rnorm_sc[...] = scale * lax.rsqrt(jnp.maximum(row_sq, _EPS))
        m_sc[...] = jnp.full(m_sc.shape, _NEG_BIG, jnp.float32)
        l_sc[...] = jnp.zeros(l_sc.shape, jnp.float32)
        t_sc[...] = jnp.zeros(t_sc.shape, jnp.float32)
        iota_sc[...] = lax.broadcasted_iota(jnp.int32, iota_sc.shape, 1)
        xmm_sc[...] = x.astype(xmm_sc.dtype)                            # matmul dtype copy

    # MXU: x @ w_norm (w already column-normalized in the wrapper, f32 accumulate),
    # then one VPU multiply folds s/||x|| -> scaled cosines.
    xw = jnp.dot(xmm_sc[...], w_ref[...], preferred_element_type=jnp.float32)
    scaled_cos = xw * rnorm_sc[...]                                     # = s * cos

    # one-hot of the label restricted to this class tile (iota reused from scratch)
    rel = lbl_ref[...] - k * c_tile                                     # (tb, 1) int32
    is_target = iota_sc[...] == rel                                     # (tb, tc)

    lg = jnp.where(is_target, scaled_cos - scale_margin, scaled_cos)    # s*(cos - m*onehot)
    if mask_classes:                # trace-time: only when C was padded to c_tile
        lg = lg + bias_ref[...]     # 0 for real classes, -1e30 for padded ones

    # accumulate the (scaled) target cosine — exactly one class tile contributes
    t_sc[...] += jnp.sum(jnp.where(is_target, scaled_cos, 0.0), axis=1, keepdims=True)

    # streaming (online) logsumexp over the class tiles
    m_prev = m_sc[...]
    m_new = jnp.maximum(m_prev, jnp.max(lg, axis=1, keepdims=True))
    l_sc[...] = (l_sc[...] * jnp.exp(m_prev - m_new)
                 + jnp.sum(jnp.exp(lg - m_new), axis=1, keepdims=True))
    m_sc[...] = m_new

    @pl.when(k == nk - 1)
    def _finalize():
        lse = m_sc[...] + jnp.log(l_sc[...])
        target_logit = t_sc[...] - scale_margin       # s*(cos_target - m)
        loss_ref[...] = lse - target_logit


def _round_up(x, mult):
    return pl.cdiv(x, mult) * mult


def cosine_margin_loss(output, w, label, m=0.35, s=64.0, *,
                       b_tile=None, c_tile=None, matmul_dtype=jnp.bfloat16,
                       vmem_budget_bytes=40 * 1024 * 1024):
    """output: [B, D] f32, w: [D, C] f32, label: [B] int -> scalar f32 loss."""
    B, D = output.shape
    C = w.shape[1]

    output = output.astype(jnp.float32)
    w = w.astype(jnp.float32)

    # Column-normalize W once in f32 (column norms MUST come from the f32 weights),
    # then ship it in the matmul dtype so the dominant HBM stream is half-width.
    col_sq = jnp.sum(w * w, axis=0, keepdims=True)
    w_n = (w * lax.rsqrt(jnp.maximum(col_sq, _EPS))).astype(matmul_dtype)

    # ---- tile selection (large defaults, clamped to problem size + VMEM budget) ----
    b_req = 256 if b_tile is None else max(8, (int(b_tile) // 8) * 8)
    c_req = 512 if c_tile is None else max(128, (int(c_tile) // 128) * 128)
    b_t = min(b_req, _round_up(B, 8))
    c_t = min(c_req, _round_up(C, 128))

    itemsize = jnp.dtype(matmul_dtype).itemsize

    def _vmem_estimate(bt, ct):
        return (2 * D * ct * itemsize                     # double-buffered W tiles
                + 2 * bt * D * 4 + bt * D * itemsize      # x tile bufs + x matmul scratch
                + 5 * bt * ct * 4                         # iota scratch + live (bt,ct) temps
                + 4 * ct * 4 + 32 * bt)                   # bias bufs + small scratches

    while _vmem_estimate(b_t, c_t) > vmem_budget_bytes:
        if c_t > 128:
            c_t = max(128, (c_t // 2 // 128) * 128)
        elif b_t > 8:
            b_t = max(8, (b_t // 2 // 8) * 8)
        else:
            break

    B_pad = _round_up(B, b_t)
    C_pad = _round_up(C, c_t)
    mask_classes = bool(C_pad != C)

    x_p = jnp.zeros((B_pad, D), jnp.float32).at[:B].set(output)
    w_p = jnp.zeros((D, C_pad), matmul_dtype).at[:, :C].set(w_n)
    lbl_p = jnp.zeros((B_pad, 1), jnp.int32).at[:B, 0].set(label.astype(jnp.int32))
    bias_p = jnp.where(jnp.arange(C_pad)[None, :] < C, 0.0, _NEG_BIG).astype(jnp.float32)

    grid = (B_pad // b_t, C_pad // c_t)

    kernel = functools.partial(
        _cosine_margin_loss_kernel,
        scale=float(s), scale_margin=float(s) * float(m),
        c_tile=c_t, mask_classes=mask_classes)

    per_example = pl.pallas_call(
        kernel,
        out_shape=jax.ShapeDtypeStruct((B_pad, 1), jnp.float32),
        grid_spec=pltpu.PrefetchScalarGridSpec(
            num_scalar_prefetch=0,
            grid=grid,
            in_specs=[
                pl.BlockSpec((b_t, D), lambda i, k: (i, 0)),   # x tile (resident over k)
                pl.BlockSpec((D, c_t), lambda i, k: (0, k)),   # streamed normalized-W tile
                pl.BlockSpec((b_t, 1), lambda i, k: (i, 0)),   # labels
                pl.BlockSpec((1, c_t), lambda i, k: (0, k)),   # padded-class bias row
            ],
            out_specs=pl.BlockSpec((b_t, 1), lambda i, k: (i, 0)),
            scratch_shapes=[
                pltpu.VMEM((b_t, 1), jnp.float32),    # s * rsqrt(row norms)
                pltpu.VMEM((b_t, 1), jnp.float32),    # running max
                pltpu.VMEM((b_t, 1), jnp.float32),    # running sum(exp)
                pltpu.VMEM((b_t, 1), jnp.float32),    # scaled target cosine
                pltpu.VMEM((b_t, c_t), jnp.int32),    # class-index iota (filled once)
                pltpu.VMEM((b_t, D), matmul_dtype),   # x in matmul dtype (cast once)
            ],
        ),
        compiler_params=pltpu.CompilerParams(
            dimension_semantics=("parallel", "arbitrary"),
            vmem_limit_bytes=64 * 1024 * 1024,
        ),
    )(x_p, w_p, lbl_p, bias_p)

    return jnp.sum(per_example[:B, 0]) / jnp.float32(B)


def cosine_margin_loss_ref(output, w, label, m=0.35, s=64.0):
    """Pure-JAX reference mirroring the PyTorch module."""
    x_norm = output / jnp.linalg.norm(output, axis=1, keepdims=True)
    w_norm = w / jnp.linalg.norm(w, axis=0, keepdims=True)
    xw = x_norm @ w_norm
    onehot = jax.nn.one_hot(label, w.shape[1], dtype=jnp.float32)
    value = s * (xw - onehot * m)
    logp = jax.nn.log_softmax(value, axis=1)
    return -jnp.mean(jnp.sum(onehot * logp, axis=1))


if __name__ == "__main__":
    key = jax.random.PRNGKey(0)
    k_x, k_w, k_l, k_x2, k_w2, k_l2, k_x3, k_w3, k_l3 = jax.random.split(key, 9)

    # toy size implied by the module (B=8, embed_dim=32, num_classes=16)
    B, D, C = 8, 32, 16
    w = jax.random.normal(k_w, (D, C), dtype=jnp.float32)
    x = jax.random.normal(k_x, (B, D), dtype=jnp.float32)
    label = jax.random.randint(k_l, (B,), 0, C, dtype=jnp.int32)

    ref = cosine_margin_loss_ref(x, w, label, m=0.35, s=64.0)

    # default path: bf16 normalized W + bf16 x on the MXU, f32 accumulation
    loss_bf16 = cosine_margin_loss(x, w, label, m=0.35, s=64.0)
    jax.block_until_ready(loss_bf16)
    assert jnp.allclose(loss_bf16, ref, rtol=5e-2, atol=5e-2), (loss_bf16, ref)

    # f32 MXU path for tight comparison against the reference
    loss_f32 = cosine_margin_loss(x, w, label, m=0.35, s=64.0,
                                  matmul_dtype=jnp.float32)
    jax.block_until_ready(loss_f32)
    assert jnp.allclose(loss_f32, ref, rtol=1e-3, atol=1e-3), (loss_f32, ref)

    # multiple B tiles and multi-C-tile streaming logsumexp (C % 128 != 0
    # -> padded-class bias path), small explicit tiles to exercise the grid.
    B2, D2, C2 = 16, 32, 300
    w2 = jax.random.normal(k_w2, (D2, C2), dtype=jnp.float32)
    x2 = jax.random.normal(k_x2, (B2, D2), dtype=jnp.float32)
    label2 = jax.random.randint(k_l2, (B2,), 0, C2, dtype=jnp.int32)

    ref2 = cosine_margin_loss_ref(x2, w2, label2, m=0.35, s=64.0)
    loss2 = cosine_margin_loss(x2, w2, label2, m=0.35, s=64.0,
                               matmul_dtype=jnp.float32, b_tile=8, c_tile=128)
    jax.block_until_ready(loss2)
    assert jnp.allclose(loss2, ref2, rtol=1e-3, atol=1e-3), (loss2, ref2)

    # C an exact multiple of 128 -> trace-time skip of the padded-class mask.
    B3, D3, C3 = 8, 32, 128
    w3 = jax.random.normal(k_w3, (D3, C3), dtype=jnp.float32)
    x3 = jax.random.normal(k_x3, (B3, D3), dtype=jnp.float32)
    label3 = jax.random.randint(k_l3, (B3,), 0, C3, dtype=jnp.int32)

    ref3 = cosine_margin_loss_ref(x3, w3, label3, m=0.35, s=64.0)
    loss3 = cosine_margin_loss(x3, w3, label3, m=0.35, s=64.0,
                               matmul_dtype=jnp.float32)
    jax.block_until_ready(loss3)
    assert jnp.allclose(loss3, ref3, rtol=1e-3, atol=1e-3), (loss3, ref3)

    print("KERNEL_OK")
</pallas_src>

<mosaic_0001>
module attributes {stable_mosaic.version = 11 : i64} {
  func.func @_cosine_margin_loss_kernel(%arg0: i32, %arg1: i32, %arg2: memref<8x32xf32, #tpu.memory_space<vmem>>, %arg3: memref<32x128xbf16, #tpu.memory_space<vmem>>, %arg4: memref<8x1xi32, #tpu.memory_space<vmem>>, %arg5: memref<1x128xf32, #tpu.memory_space<vmem>>, %arg6: memref<8x1xf32, #tpu.memory_space<vmem>>, %arg7: memref<8x1xf32, #tpu.memory_space<vmem>>, %arg8: memref<8x1xf32, #tpu.memory_space<vmem>>, %arg9: memref<8x1xf32, #tpu.memory_space<vmem>>, %arg10: memref<8x1xf32, #tpu.memory_space<vmem>>, %arg11: memref<8x128xi32, #tpu.memory_space<vmem>>, %arg12: memref<8x32xbf16, #tpu.memory_space<vmem>>) attributes {dimension_semantics = [#tpu.dimension_semantics<parallel>, #tpu.dimension_semantics<arbitrary>], iteration_bounds = array<i64: 1, 1>, scalar_prefetch = 0 : i64, scratch_operands = 6 : i64, tpu.core_type = #tpu.core_type<tc>, window_params = [{transform_indices = @transform_0, window_bounds = array<i64: 8, 32>}, {transform_indices = @transform_1, window_bounds = array<i64: 32, 128>}, {transform_indices = @transform_2, window_bounds = array<i64: 8, 1>}, {transform_indices = @transform_3, window_bounds = array<i64: 1, 128>}, {transform_indices = @transform_4, window_bounds = array<i64: 8, 1>}]} {
    %c0_i32 = arith.constant 0 : i32
    %0 = arith.cmpi eq, %arg1, %c0_i32 : i32
    %1 = arith.extui %0 : i1 to i32
    %c0_i32_0 = arith.constant 0 : i32
    %2 = arith.cmpi ne, %1, %c0_i32_0 : i32
    scf.if %2 {
      %c0_31 = arith.constant 0 : index
      %c0_32 = arith.constant 0 : index
      %48 = vector.load %arg2[%c0_31, %c0_32] : memref<8x32xf32, #tpu.memory_space<vmem>>, vector<8x32xf32>
      %49 = arith.mulf %48, %48 : vector<8x32xf32>
      %cst_33 = arith.constant dense<0.000000e+00> : vector<8xf32>
      %50 = vector.multi_reduction <add>, %49, %cst_33 [1] : vector<8x32xf32> to vector<8xf32>
      %51 = vector.shape_cast %50 : vector<8xf32> to vector<8x1xf32>
      %cst_34 = arith.constant 9.99999996E-13 : f32
      %52 = vector.broadcast %cst_34 : f32 to vector<8x1xf32>
      %53 = arith.maximumf %51, %52 : vector<8x1xf32>
      %54 = math.rsqrt %53 : vector<8x1xf32>
      %cst_35 = arith.constant 6.400000e+01 : f32
      %55 = vector.broadcast %cst_35 : f32 to vector<8x1xf32>
      %56 = arith.mulf %55, %54 : vector<8x1xf32>
      %c0_36 = arith.constant 0 : index
      %c0_37 = arith.constant 0 : index
      %57 = vector.load %arg7[%c0_36, %c0_37] : memref<8x1xf32, #tpu.memory_space<vmem>>, vector<8x1xf32>
      tpu.vector_store %arg7[%c0_36, %c0_37], %56 {strides = array<i32>} : memref<8x1xf32, #tpu.memory_space<vmem>>, vector<8x1xf32>,
      %cst_38 = arith.constant -1.000000e+30 : f32
      %58 = vector.broadcast %cst_38 : f32 to vector<8x1xf32>
      %c0_39 = arith.constant 0 : index
      %c0_40 = arith.constant 0 : index
      %59 = vector.load %arg8[%c0_39, %c0_40] : memref<8x1xf32, #tpu.memory_space<vmem>>, vector<8x1xf32>
      tpu.vector_store %arg8[%c0_39, %c0_40], %58 {strides = array<i32>} : memref<8x1xf32, #tpu.memory_space<vmem>>, vector<8x1xf32>,
      %cst_41 = arith.constant 0.000000e+00 : f32
      %60 = vector.broadcast %cst_41 : f32 to vector<8x1xf32>
      %c0_42 = arith.constant 0 : index
      %c0_43 = arith.constant 0 : index
      %61 = vector.load %arg9[%c0_42, %c0_43] : memref<8x1xf32, #tpu.memory_space<vmem>>, vector<8x1xf32>
      tpu.vector_store %arg9[%c0_42, %c0_43], %60 {strides = array<i32>} : memref<8x1xf32, #tpu.memory_space<vmem>>, vector<8x1xf32>,
      %cst_44 = arith.constant 0.000000e+00 : f32
      %62 = vector.broadcast %cst_44 : f32 to vector<8x1xf32>
      %c0_45 = arith.constant 0 : index
      %c0_46 = arith.constant 0 : index
      %63 = vector.load %arg10[%c0_45, %c0_46] : memref<8x1xf32, #tpu.memory_space<vmem>>, vector<8x1xf32>
      tpu.vector_store %arg10[%c0_45, %c0_46], %62 {strides = array<i32>} : memref<8x1xf32, #tpu.memory_space<vmem>>, vector<8x1xf32>,
      %64 = tpu.iota {dimensions = array<i32: 1>} : vector<8x128xi32>
      %c0_47 = arith.constant 0 : index
      %c0_48 = arith.constant 0 : index
      %65 = vector.load %arg11[%c0_47, %c0_48] : memref<8x128xi32, #tpu.memory_space<vmem>>, vector<8x128xi32>
      tpu.vector_store %arg11[%c0_47, %c0_48], %64 {strides = array<i32>} : memref<8x128xi32, #tpu.memory_space<vmem>>, vector<8x128xi32>,
      %66 = arith.truncf %48 : vector<8x32xf32> to vector<8x32xbf16>
      %c0_49 = arith.constant 0 : index
      %c0_50 = arith.constant 0 : index
      %67 = vector.load %arg12[%c0_49, %c0_50] : memref<8x32xbf16, #tpu.memory_space<vmem>>, vector<8x32xbf16>
      tpu.vector_store %arg12[%c0_49, %c0_50], %66 {strides = array<i32>} : memref<8x32xbf16, #tpu.memory_space<vmem>>, vector<8x32xbf16>,
    } else {
    }
    %c0 = arith.constant 0 : index
    %c0_1 = arith.constant 0 : index
    %3 = vector.load %arg12[%c0, %c0_1] : memref<8x32xbf16, #tpu.memory_space<vmem>>, vector<8x32xbf16>
    %c0_2 = arith.constant 0 : index
    %c0_3 = arith.constant 0 : index
    %4 = vector.load %arg3[%c0_2, %c0_3] : memref<32x128xbf16, #tpu.memory_space<vmem>>, vector<32x128xbf16>
    %cst = arith.constant dense<0.000000e+00> : vector<8x128xf32>
    %5 = tpu.matmul %3, %4, %cst {dimension_numbers = #tpu.dot_dimension_numbers<[1], [0], [0], [1], [0, 0, 1, 1], [], []>} : vector<8x32xbf16>, vector<32x128xbf16>, vector<8x128xf32> -> vector<8x128xf32>
    %c0_4 = arith.constant 0 : index
    %c0_5 = arith.constant 0 : index
    %6 = vector.load %arg7[%c0_4, %c0_5] : memref<8x1xf32, #tpu.memory_space<vmem>>, vector<8x1xf32>
    %7 = vector.broadcast %6 : vector<8x1xf32> to vector<8x128xf32>
    %8 = arith.mulf %5, %7 : vector<8x128xf32>
    %c0_6 = arith.constant 0 : index
    %c0_7 = arith.constant 0 : index
    %9 = vector.load %arg4[%c0_6, %c0_7] : memref<8x1xi32, #tpu.memory_space<vmem>>, vector<8x1xi32>
    %c128_i32 = arith.constant 128 : i32
    %10 = arith.muli %arg1, %c128_i32 : i32
    %11 = vector.broadcast %10 : i32 to vector<8x1xi32>
    %12 = arith.subi %9, %11 : vector<8x1xi32>
    %c0_8 = arith.constant 0 : index
    %c0_9 = arith.constant 0 : index
    %13 = vector.load %arg11[%c0_8, %c0_9] : memref<8x128xi32, #tpu.memory_space<vmem>>, vector<8x128xi32>
    %14 = vector.broadcast %12 : vector<8x1xi32> to vector<8x128xi32>
    %15 = arith.cmpi eq, %13, %14 : vector<8x128xi32>
    %cst_10 = arith.constant 2.240000e+01 : f32
    %16 = vector.broadcast %cst_10 : f32 to vector<8x128xf32>
    %17 = arith.subf %8, %16 : vector<8x128xf32>
    %18 = arith.select %15, %17, %8 : vector<8x128xi1>, vector<8x128xf32>
    %c0_11 = arith.constant 0 : index
    %c0_12 = arith.constant 0 : index
    %19 = vector.load %arg5[%c0_11, %c0_12] : memref<1x128xf32, #tpu.memory_space<vmem>>, vector<1x128xf32>
    %20 = vector.broadcast %19 : vector<1x128xf32> to vector<8x128xf32>
    %21 = arith.addf %18, %20 : vector<8x128xf32>
    %c0_13 = arith.constant 0 : index
    %c0_14 = arith.constant 0 : index
    %22 = vector.load %arg10[%c0_13, %c0_14] : memref<8x1xf32, #tpu.memory_space<vmem>>, vector<8x1xf32>
    %cst_15 = arith.constant 0.000000e+00 : f32
    %23 = vector.broadcast %cst_15 : f32 to vector<8x128xf32>
    %24 = arith.select %15, %8, %23 : vector<8x128xi1>, vector<8x128xf32>
    %cst_16 = arith.constant dense<0.000000e+00> : vector<8xf32>
    %25 = vector.multi_reduction <add>, %24, %cst_16 [1] : vector<8x128xf32> to vector<8xf32>
    %26 = vector.shape_cast %25 : vector<8xf32> to vector<8x1xf32>
    %27 = arith.addf %22, %26 : vector<8x1xf32>
    %c0_17 = arith.constant 0 : index
    %c0_18 = arith.constant 0 : index
    %28 = vector.load %arg10[%c0_17, %c0_18] : memref<8x1xf32, #tpu.memory_space<vmem>>, vector<8x1xf32>
    tpu.vector_store %arg10[%c0_17, %c0_18], %27 {strides = array<i32>} : memref<8x1xf32, #tpu.memory_space<vmem>>, vector<8x1xf32>,
    %c0_19 = arith.constant 0 : index
    %c0_20 = arith.constant 0 : index
    %29 = vector.load %arg8[%c0_19, %c0_20] : memref<8x1xf32, #tpu.memory_space<vmem>>, vector<8x1xf32>
    %cst_21 = arith.constant dense<0xFF800000> : vector<8xf32>
    %30 = vector.multi_reduction <maximumf>, %21, %cst_21 [1] : vector<8x128xf32> to vector<8xf32>
    %31 = vector.shape_cast %30 : vector<8xf32> to vector<8x1xf32>
    %32 = arith.maximumf %29, %31 : vector<8x1xf32>
    %c0_22 = arith.constant 0 : index
    %c0_23 = arith.constant 0 : index
    %33 = vector.load %arg9[%c0_22, %c0_23] : memref<8x1xf32, #tpu.memory_space<vmem>>, vector<8x1xf32>
    %34 = arith.subf %29, %32 : vector<8x1xf32>
    %35 = math.exp %34 : vector<8x1xf32>
    %36 = arith.mulf %33, %35 : vector<8x1xf32>
    %37 = vector.broadcast %32 : vector<8x1xf32> to vector<8x128xf32>
    %38 = arith.subf %21, %37 : vector<8x128xf32>
    %39 = math.exp %38 : vector<8x128xf32>
    %cst_24 = arith.constant dense<0.000000e+00> : vector<8xf32>
    %40 = vector.multi_reduction <add>, %39, %cst_24 [1] : vector<8x128xf32> to vector<8xf32>
    %41 = vector.shape_cast %40 : vector<8xf32> to vector<8x1xf32>
    %42 = arith.addf %36, %41 : vector<8x1xf32>
    %c0_25 = arith.constant 0 : index
    %c0_26 = arith.constant 0 : index
    %43 = vector.load %arg9[%c0_25, %c0_26] : memref<8x1xf32, #tpu.memory_space<vmem>>, vector<8x1xf32>
    tpu.vector_store %arg9[%c0_25, %c0_26], %42 {strides = array<i32>} : memref<8x1xf32, #tpu.memory_space<vmem>>, vector<8x1xf32>,
    %c0_27 = arith.constant 0 : index
    %c0_28 = arith.constant 0 : index
    %44 = vector.load %arg8[%c0_27, %c0_28] : memref<8x1xf32, #tpu.memory_space<vmem>>, vector<8x1xf32>
    tpu.vector_store %arg8[%c0_27, %c0_28], %32 {strides = array<i32>} : memref<8x1xf32, #tpu.memory_space<vmem>>, vector<8x1xf32>,
    %c0_i32_29 = arith.constant 0 : i32
    %45 = arith.cmpi eq, %arg1, %c0_i32_29 : i32
    %46 = arith.extui %45 : i1 to i32
    %c0_i32_30 = arith.constant 0 : i32
    %47 = arith.cmpi ne, %46, %c0_i32_30 : i32
    scf.if %47 {
      %c0_31 = arith.constant 0 : index
      %c0_32 = arith.constant 0 : index
      %48 = vector.load %arg8[%c0_31, %c0_32] : memref<8x1xf32, #tpu.memory_space<vmem>>, vector<8x1xf32>
      %c0_33 = arith.constant 0 : index
      %c0_34 = arith.constant 0 : index
      %49 = vector.load %arg9[%c0_33, %c0_34] : memref<8x1xf32, #tpu.memory_space<vmem>>, vector<8x1xf32>
      %50 = math.log %49 : vector<8x1xf32>
      %51 = arith.addf %48, %50 : vector<8x1xf32>
      %c0_35 = arith.constant 0 : index
      %c0_36 = arith.constant 0 : index
      %52 = vector.load %arg10[%c0_35, %c0_36] : memref<8x1xf32, #tpu.memory_space<vmem>>, vector<8x1xf32>
      %cst_37 = arith.constant 2.240000e+01 : f32
      %53 = vector.broadcast %cst_37 : f32 to vector<8x1xf32>
      %54 = arith.subf %52, %53 : vector<8x1xf32>
      %55 = arith.subf %51, %54 : vector<8x1xf32>
      %c0_38 = arith.constant 0 : index
      %c0_39 = arith.constant 0 : index
      %56 = vector.load %arg6[%c0_38, %c0_39] : memref<8x1xf32, #tpu.memory_space<vmem>>, vector<8x1xf32>
      tpu.vector_store %arg6[%c0_38, %c0_39], %55 {strides = array<i32>} : memref<8x1xf32, #tpu.memory_space<vmem>>, vector<8x1xf32>,
    } else {
    }
    return
  }
  func.func @transform_0(%arg0: i32, %arg1: i32) -> (i32, i32) {
    %c0_i32 = arith.constant 0 : i32
    %c0_i32_0 = arith.constant 0 : i32
    return %arg0, %c0_i32 : i32, i32
  }
  func.func @transform_1(%arg0: i32, %arg1: i32) -> (i32, i32) {
    %c0_i32 = arith.constant 0 : i32
    %c0_i32_0 = arith.constant 0 : i32
    return %c0_i32, %arg1 : i32, i32
  }
  func.func @transform_2(%arg0: i32, %arg1: i32) -> (i32, i32) {
    %c0_i32 = arith.constant 0 : i32
    %c0_i32_0 = arith.constant 0 : i32
    return %arg0, %c0_i32 : i32, i32
  }
  func.func @transform_3(%arg0: i32, %arg1: i32) -> (i32, i32) {
    %c0_i32 = arith.constant 0 : i32
    %c0_i32_0 = arith.constant 0 : i32
    return %c0_i32, %arg1 : i32, i32
  }
  func.func @transform_4(%arg0: i32, %arg1: i32) -> (i32, i32) {
    %c0_i32 = arith.constant 0 : i32
    %c0_i32_0 = arith.constant 0 : i32
    return %arg0, %c0_i32 : i32, i32
  }
}

</mosaic_0001>

<llo_original>
// kernel: tpu_custom_call.1
$region0: #{tpu_custom_call.1}
  #allocation0 [shape = 'u32[]', space=smem, size = 0x4, offset = 0x4, fixed_abs, tag = 'smem constant byte address 0x4 - core index']
  #allocation1 [shape = 'u32[144,128]{1,0:T(1,128)}', space=vmem, size = 0x12000, scoped, tag = 'internal scratch']
  #allocation2 [shape = 'f32[8,1]{1,0:T(8,128)}', space=vmem, size = 0x1000, scoped, tag = 'scratch operand']
  #allocation3 [shape = 'f32[8,1]{1,0:T(8,128)}', space=vmem, size = 0x1000, scoped, tag = 'scratch operand']
  #allocation4 [shape = 'f32[8,1]{1,0:T(8,128)}', space=vmem, size = 0x1000, scoped, tag = 'scratch operand']
  #allocation5 [shape = 'f32[8,1]{1,0:T(8,128)}', space=vmem, size = 0x1000, scoped, tag = 'scratch operand']
  #allocation6 [shape = 's32[8,128]{1,0:T(8,128)}', space=vmem, size = 0x1000, scoped, tag = 'scratch operand']
  #allocation7 [shape = 'bf16[8,32]{1,0:T(8,128)(2,1)}', space=vmem, size = 0x800, scoped, tag = 'scratch operand']
  %s0 = inlined_call_operand.hbm [shape: f32[8,32], index: 0, kind: input, shape index: {}]
  %s1 = inlined_call_operand.hbm [shape: bf16[32,128], index: 1, kind: input, shape index: {}]
  %s2 = inlined_call_operand.hbm [shape: s32[8,1], index: 2, kind: input, shape index: {}]
  %s3 = inlined_call_operand.hbm [shape: f32[1,128], index: 3, kind: input, shape index: {}]
  %s4 = inlined_call_operand.hbm [shape: f32[8,1], index: 4, kind: output, shape index: {}]
  %s5 = sld [smem:[#allocation0]]
  $region50: #{tpu_custom_call.1} parent=0
    _
  %s7 = ssub.s32 1, %s5
  %s8 = scalar_select 0, %s7, %s5
  $region1: #{tpu_custom_call.1} parent=0
    #allocation8 [shape = 'u8[4096]{0}', space=vmem, size = 0x1000, scoped, tag = 'input window, operand 0, single buffered']
    #allocation9 [shape = 's32[1]{0}', space=sflag, size = 0x4, scoped, tag = 'scoped memory for tpu_custom_call.1']
    #allocation10 [shape = 's32[1]{0}', space=sflag, size = 0x4, scoped, tag = 'scoped memory for tpu_custom_call.1']
    #allocation11 [shape = 'u8[8192]{0}', space=vmem, size = 0x2000, scoped, tag = 'input window, operand 1, single buffered']
    #allocation12 [shape = 's32[1]{0}', space=sflag, size = 0x4, scoped, tag = 'scoped memory for tpu_custom_call.1']
    #allocation13 [shape = 'u8[4096]{0}', space=vmem, size = 0x1000, scoped, tag = 'input window, operand 2, single buffered']
    #allocation14 [shape = 'u8[512]{0}', space=vmem, size = 0x400, scoped, tag = 'input window, operand 3, single buffered']
    #allocation15 [shape = 's32[1]{0}', space=sflag, size = 0x4, scoped, tag = 'scoped memory for tpu_custom_call.1']
    #allocation16 [shape = 'u8[4096]{0}', space=vmem, size = 0x1000, scoped, tag = 'output window, operand 0, single buffered']
    %9 = vsyncpa [#allocation9], 0
    %10 = vsyncpa [#allocation12], 0
    %11 = vsyncpa [#allocation15], 0
    %12 = vsyncpa [#allocation10], 0
    // Predicated region
    $region2: #{tpu_custom_call.1} parent=1 // pred_check
      _
    $region3: #{tpu_custom_call.1} parent=1 // pred_check_branch
      %14 = sbr.rel (0) target = $region5
    $region4: #{tpu_custom_call.1} parent=1 // pred_region
      %s16 = ssub.s32 128, 128
      %17 = vsyncadd [#allocation9], %s16
      %s19 = sshll.u32 [#allocation8], 4
      %s20 = int_to_ptr.vmem [resolvable:$true] %s19
      %22 = dma.hbm_to_vmem [thread:$0]  %s0, 128, %s20, [#allocation9]
    $region5: #{tpu_custom_call.1} parent=1 // pred_fallthru
      _
    // Predicated region
    $region6: #{tpu_custom_call.1} parent=1 // pred_check
      _
    $region7: #{tpu_custom_call.1} parent=1 // pred_check_branch
      %24 = sbr.rel (0) target = $region9
    $region8: #{tpu_custom_call.1} parent=1 // pred_region
      %s26 = ssub.s32 256, 256
      %27 = vsyncadd [#allocation12], %s26
      %s28 = sshll.u32 [#allocation11], 4
      %s29 = int_to_ptr.vmem [resolvable:$true] %s28
      %34 = dma.hbm_to_vmem [thread:$0]  %s1, 256, %s29, [#allocation12], 64, 64, 4
    $region9: #{tpu_custom_call.1} parent=1 // pred_fallthru
      _
    // Predicated region
    $region10: #{tpu_custom_call.1} parent=1 // pred_check
      _
    $region11: #{tpu_custom_call.1} parent=1 // pred_check_branch
      %36 = sbr.rel (0) target = $region13
    $region12: #{tpu_custom_call.1} parent=1 // pred_region
      %s38 = ssub.s32 128, 128
      %39 = vsyncadd [#allocation12], %s38
      %s41 = sshll.u32 [#allocation13], 4
      %s42 = int_to_ptr.vmem [resolvable:$true] %s41
      %44 = dma.hbm_to_vmem [thread:$0]  %s2, 128, %s42, [#allocation12]
    $region13: #{tpu_custom_call.1} parent=1 // pred_fallthru
      _
    // Predicated region
    $region14: #{tpu_custom_call.1} parent=1 // pred_check
      _
    $region15: #{tpu_custom_call.1} parent=1 // pred_check_branch
      %46 = sbr.rel (0) target = $region17
    $region16: #{tpu_custom_call.1} parent=1 // pred_region
      %s48 = ssub.s32 16, 16
      %49 = vsyncadd [#allocation15], %s48
      %s51 = sshll.u32 [#allocation14], 4
      %s52 = int_to_ptr.vmem [resolvable:$true] %s51
      %54 = dma.hbm_to_vmem [thread:$0]  %s3, 16, %s52, [#allocation15]
    $region17: #{tpu_custom_call.1} parent=1 // pred_fallthru
      _
    // Predicated region
    $region18: #{tpu_custom_call.1} parent=1 // pred_check
      _
    $region19: #{tpu_custom_call.1} parent=1 // pred_check_branch
      %56 = sbr.rel (0) target = $region21
    $region20: #{tpu_custom_call.1} parent=1 // pred_region
      %57 = dma.done [#allocation9], 128
    $region21: #{tpu_custom_call.1} parent=1 // pred_fallthru
      _
    // Predicated region
    $region22: #{tpu_custom_call.1} parent=1 // pred_check
      _
    $region23: #{tpu_custom_call.1} parent=1 // pred_check_branch
      %59 = sbr.rel (0) target = $region25
    $region24: #{tpu_custom_call.1} parent=1 // pred_region
      %60 = dma.done [#allocation12], 256
    $region25: #{tpu_custom_call.1} parent=1 // pred_fallthru
      _
    // Predicated region
    $region26: #{tpu_custom_call.1} parent=1 // pred_check
      _
    $region27: #{tpu_custom_call.1} parent=1 // pred_check_branch
      %62 = sbr.rel (0) target = $region29
    $region28: #{tpu_custom_call.1} parent=1 // pred_region
      %63 = dma.done [#allocation12], 128
    $region29: #{tpu_custom_call.1} parent=1 // pred_fallthru
      _
    // Predicated region
    $region30: #{tpu_custom_call.1} parent=1 // pred_check
      _
    $region31: #{tpu_custom_call.1} parent=1 // pred_check_branch
      %65 = sbr.rel (0) target = $region33
    $region32: #{tpu_custom_call.1} parent=1 // pred_region
      %66 = dma.done [#allocation15], 16
    $region33: #{tpu_custom_call.1} parent=1 // pred_fallthru
      _
    %p68 = scmp.eq.s32.totalorder 0, 0
    // Predicated region
    $region34: #{tpu_custom_call.1} parent=1 // pred_check
      %p69 = pneg %p68
    $region35: #{tpu_custom_call.1} parent=1 // pred_check_branch
      %71 = sbr.rel (%p69) target = $region37
    $region36: #{tpu_custom_call.1} parent=1 // pred_region
      %v72 = vld [vmem:[#allocation8] sm:$0xff]
      %v73 = vmul.f32 %v72, %v72
      %vm74 = vcmask 261120
      %v75 = vsel %vm74, %v73, 0.0
      %76 = vadd.xlane.f32.xlu0 %v75
      %v77 = vpop.xlane.xlu0 %76
      %v78 = vmax.f32 %v77, 1e-12
      %v79 = vrsqrt.pop %v78
      %v80 = vmul.f32 %v79, 64.0
      %vm81 = vcmask 7168
      %82 = vst.msk [vmem:[#allocation2] sm:$0xff] %vm81, %v80
      %83 = vst.msk [vmem:[#allocation3] sm:$0xff] %vm81, -1e+30
      %84 = vst.msk [vmem:[#allocation4] sm:$0xff] %vm81, 0.0
      %85 = vst.msk [vmem:[#allocation5] sm:$0xff] %vm81, 0.0
      %v86 = vlaneseq
      %v87 = vand.u32 %v86, 127
      %88 = vst [vmem:[#allocation6] sm:$0xff] %v87
      %v89 = vpack.c.bf16 %v72, %v72
      %vm90 = vcmask 257024
      %91 = vst.msk [vmem:[#allocation7] sm:$0xf] %vm90, %v89
    $region37: #{tpu_custom_call.1} parent=1 // pred_fallthru
      _
    %v92 = vld [vmem:[#allocation7] sm:$0xf]
    %v93 = vld [vmem:[#allocation11] sm:$0xf]
    %v94 = vld [vmem:[#allocation11 + $0x4] sm:$0xf]
    %v95 = vld [vmem:[#allocation11 + $0x8] sm:$0xf]
    %v96 = vld [vmem:[#allocation11 + $0xc] sm:$0xf]
    %v101 = vunpack.c.l.b16 %v93
    %v102 = vunpack.c.l.b16 %v94
    %v103 = vunpack.c.l.b16 %v95
    %v104 = vunpack.c.l.b16 %v96
    %v105 = vpack.c.b16 %v102, %v101
    %v106 = vpack.c.b16 %v104, %v103
    %vm109 = vcmask 261120
    %v111 = vsel %vm109, %v92, 0
    %113 = vmatprep.subr.bf16.mxu0 0
    %114 = vmatpush1.bf16.msra.mxu0 %v105
    %115 = vmatprep.subr.bf16.mxu0 0
    %116 = vmatpush1.bf16.msra.mxu0 %v106
    %117 = vmatprep.subr.bf16.mxu0 0
    %118 = vmatpush1.bf16.msra.mxu0 0
    %119 = vmatprep.subr.bf16.mxu0 0
    %120 = vmatpush1.bf16.msra.mxu0 0
    %121 = vmatprep.subr.bf16.mxu0 0
    %122 = vmatpush1.bf16.msra.mxu0 0
    %123 = vmatprep.subr.bf16.mxu0 0
    %124 = vmatpush1.bf16.msra.mxu0 0
    %125 = vmatprep.subr.bf16.mxu0 0
    %126 = vmatpush1.bf16.msra.mxu0 0
    %127 = vmatprep.subr.bf16.mxu0 0
    %128 = vmatpush1.bf16.msra.mxu0 0
    %129 = vmatprep.subr.bf16.mxu0 0
    %130 = vmatpush1.bf16.msra.mxu0 0
    %131 = vmatprep.subr.bf16.mxu0 0
    %132 = vmatpush1.bf16.msra.mxu0 0
    %133 = vmatprep.subr.bf16.mxu0 0
    %134 = vmatpush1.bf16.msra.mxu0 0
    %135 = vmatprep.subr.bf16.mxu0 0
    %136 = vmatpush1.bf16.msra.mxu0 0
    %137 = vmatprep.subr.bf16.mxu0 0
    %138 = vmatpush1.bf16.msra.mxu0 0
    %139 = vmatprep.subr.bf16.mxu0 0
    %140 = vmatpush1.bf16.msra.mxu0 0
    %141 = vmatprep.subr.bf16.mxu0 0
    %142 = vmatpush1.bf16.msra.mxu0 0
    %143 = vmatprep.subr.bf16.mxu0 0
    %144 = vmatpush1.bf16.msra.mxu0 0
    %145 = vmatprep.mubr.bf16.mxu0 0
    %146 = vmatmul.mubr.bf16.gmra.mrb[0].mxu0 %v111
    %v147 = vpop.f32.mrb[0].mxu0
    %v148 = vadd.f32 0.0, %v147
    %v149 = vpop.f32.mrb[0].mxu0
    %v150 = vpop.f32.mrb[0].mxu0
    %v151 = vpop.f32.mrb[0].mxu0
    %152 = vdwg.mxu0
    %v153 = vld [vmem:[#allocation2] sm:$0xff]
    %155 = vset.pattern.permute.xlu0 0
    %156 = vperm.xlu0 %155, %v153
    %v157 = vpop.permute.xlu0 %156
    %v159 = vmul.f32 %v148, %v157
    %v160 = vld [vmem:[#allocation13] sm:$0xff]
    %s161 = smul.u32 0, 128
    %v162 = vstv %s161
    %v163 = vsub.s32 %v160, %v162
    %v164 = vld [vmem:[#allocation6] sm:$0xff]
    %165 = vset.pattern.permute.xlu0 0
    %166 = vperm.xlu0 %165, %v163
    %v167 = vpop.permute.xlu0 %166
    %vm168 = vcmp.eq.s32.totalorder %v164, %v167
    %v169 = vsub.f32 %v159, 22.4
    %v170 = vsel %vm168, %v169, %v159
    %v171 = vld [vmem:[#allocation14] sm:$0x1]
    %v173 = vlaneseq
    %v174 = vshrl.u32 %v173, 7
    %v175 = vsub.s32 0, %v174
    %v176 = vrot.slane %v171, %v175
    %v178 = vadd.f32 %v170, %v176
    %v179 = vld [vmem:[#allocation5] sm:$0xff]
    %v180 = vsel %vm168, %v159, 0.0
    %181 = vadd.xlane.f32.xlu0 %v180
    %v182 = vpop.xlane.xlu0 %181
    %v183 = vadd.f32 %v179, %v182
    %vm184 = vcmask 7168
    %185 = vst.msk [vmem:[#allocation5] sm:$0xff] %vm184, %v183
    %v186 = vld [vmem:[#allocation3] sm:$0xff]
    %187 = vmax.xlane.f32.xlu0 %v178
    %v188 = vpop.xlane.xlu0 %187
    %v189 = vmax.f32 %v186, %v188
    %v190 = vld [vmem:[#allocation4] sm:$0xff]
    %v191 = vsub.f32 %v186, %v189
    %v192 = vmul.f32 %v191, 1.442695
    %v193 = vpow.pop %v192
    %v194 = vmul.f32 %v190, %v193
    %196 = vset.pattern.permute.xlu0 0
    %197 = vperm.xlu0 %196, %v189
    %v198 = vpop.permute.xlu0 %197
    %v200 = vsub.f32 %v178, %v198
    %v201 = vmul.f32 %v200, 1.442695
    %v202 = vpow.pop %v201
    %203 = vadd.xlane.f32.xlu0 %v202
    %v204 = vpop.xlane.xlu0 %203
    %v205 = vadd.f32 %v194, %v204
    %206 = vst.msk [vmem:[#allocation4] sm:$0xff] %vm184, %v205
    %207 = vst.msk [vmem:[#allocation3] sm:$0xff] %vm184, %v189
    // Predicated region
    $region38: #{tpu_custom_call.1} parent=1 // pred_check
      %p208 = pneg %p68
    $region39: #{tpu_custom_call.1} parent=1 // pred_check_branch
      %210 = sbr.rel (%p208) target = $region41
    $region40: #{tpu_custom_call.1} parent=1 // pred_region
      %v211 = vld [vmem:[#allocation3] sm:$0xff]
      %v212 = vld [vmem:[#allocation4] sm:$0xff]
      %v213 = vlog2.pop %v212
      %v214 = vmul.f32 %v213, 0.6931472
      %v215 = vadd.f32 %v211, %v214
      %v216 = vld [vmem:[#allocation5] sm:$0xff]
      %v217 = vsub.f32 %v216, 22.4
      %v218 = vsub.f32 %v215, %v217
      %219 = vst.msk [vmem:[#allocation16] sm:$0xff] %vm184, %v218
    $region41: #{tpu_custom_call.1} parent=1 // pred_fallthru
      _
    // Predicated region
    $region42: #{tpu_custom_call.1} parent=1 // pred_check
      _
    $region43: #{tpu_custom_call.1} parent=1 // pred_check_branch
      %221 = sbr.rel (0) target = $region45
    $region44: #{tpu_custom_call.1} parent=1 // pred_region
      %s223 = ssub.s32 128, 128
      %224 = vsyncadd [#allocation10], %s223
      %s226 = sshll.u32 [#allocation16], 4
      %s227 = int_to_ptr.vmem [resolvable:$true] %s226
      %229 = dma.vmem_to_hbm [thread:$0]  %s227, 128, %s4, [#allocation10]
    $region45: #{tpu_custom_call.1} parent=1 // pred_fallthru
      _
    // Predicated region
    $region46: #{tpu_custom_call.1} parent=1 // pred_check
      _
    $region47: #{tpu_custom_call.1} parent=1 // pred_check_branch
      %231 = sbr.rel (0) target = $region49
    $region48: #{tpu_custom_call.1} parent=1 // pred_region
      %232 = dma.done [#allocation10], 128
    $region49: #{tpu_custom_call.1} parent=1 // pred_fallthru
      _
    %233 = vsyncpa [#allocation9], 1
    %234 = vsyncpa [#allocation12], 1
    %235 = vsyncpa [#allocation15], 1
    %236 = vsyncpa [#allocation10], 1

</llo_original>
